<compile_context>
chip_gen: v5e
topology: v5e:2x2
jax: 0.10.0
libtpu: 0.0.40
codegen_flags: <defaults>
</compile_context>

<pallas_src>
import functools

import jax
import jax.numpy as jnp
from jax.experimental import pallas as pl
from jax.experimental.pallas import tpu as pltpu


def mha_kernel(x_ref, wqkv_ref, wp_ref, bp_ref, o_ref, concat_ref, *, n_heads, head_size):
    """One grid step == one block of `Bt` batch elements."""
    Bt, T, C = x_ref.shape
    C_pad = o_ref.shape[-1]
    H, hs = n_heads, head_size

    x2 = x_ref[...].reshape(Bt * T, C)                                  # bf16

    # Fused Q/K/V projection: single bf16 MXU matmul, f32 accumulation.
    # 1/sqrt(head_size) is pre-folded into the Q columns in the wrapper.
    qkv = jnp.dot(x2, wqkv_ref[...], preferred_element_type=jnp.float32)   # (Bt*T, 3*H*hs)
    qkv = qkv.reshape(Bt, T, 3 * H * hs).astype(jnp.bfloat16)

    # Causal mask (== tril buffer in the PyTorch head). Finite large-negative so a fully
    # masked row can never produce NaN.
    row = jax.lax.broadcasted_iota(jnp.int32, (T, T), 0)
    col = jax.lax.broadcasted_iota(jnp.int32, (T, T), 1)
    causal = (row >= col)[None]          # (1, T, T), broadcasts over batch
    neg_big = jnp.float32(-1e30)

    for h in range(H):                   # static unroll over heads (see TODO: batch heads)
        q = qkv[:, :, h * hs:(h + 1) * hs]                       # (Bt, T, hs), pre-scaled
        k = qkv[:, :, (H + h) * hs:(H + h + 1) * hs]             # (Bt, T, hs)
        v = qkv[:, :, (2 * H + h) * hs:(2 * H + h + 1) * hs]     # (Bt, T, hs)

        # Scores: transpose folded into the contraction (no k.T materialization).
        s = jnp.einsum('btd,bsd->bts', q, k, preferred_element_type=jnp.float32)
        s = jnp.where(causal, s, neg_big)
        s = s - jnp.max(s, axis=-1, keepdims=True)
        p = jnp.exp(s)                                                   # f32 softmax math
        p = p * pl.reciprocal(jnp.sum(p, axis=-1, keepdims=True), approx=True)

        head_out = jnp.einsum('bts,bsd->btd', p.astype(jnp.bfloat16), v,
                              preferred_element_type=jnp.float32)        # (Bt, T, hs)

        # Write this head's output into the VMEM concat buffer (kills its live range).
        concat_ref[:, h * hs:(h + 1) * hs] = (
            head_out.reshape(Bt * T, hs).astype(jnp.bfloat16))

    # ONE full-depth (K=C) projection matmul over the concatenated heads.
    proj = jnp.dot(concat_ref[...], wp_ref[...],
                   preferred_element_type=jnp.float32)                   # (Bt*T, C_pad)
    out = proj + bp_ref[...]             # bias kept f32 (tiny; exact add)
    # dropout(p=0.0) in eval/inference is an identity.
    o_ref[...] = out.reshape(Bt, T, C_pad).astype(o_ref.dtype)


def _tpu_vmem_capacity_bytes():
    try:
        return int(pltpu.get_tpu_info().vmem_capacity_bytes)
    except Exception:
        return 64 * 1024 * 1024          # assume the smallest target gen (v7x) if unknown


def _vmem_bytes_estimate(block_b, T, C, C_pad, head_size, x_bytes=2, out_bytes=4):
    """Rough resident-set estimate for one grid step (conservative)."""
    bt = block_b * T
    weights = 2 * (C * 3 * C * 2 + C * C_pad * 2 + C_pad * 4)   # counted double-buffered
    io = 2 * bt * C * x_bytes + 2 * bt * C_pad * out_bytes      # double-buffered x / out
    concat = bt * C * 2                                         # bf16 scratch
    qkv_f32 = bt * 3 * C * 4                                    # f32 matmul result
    attn = 2 * block_b * T * T * 4 + bt * head_size * 4         # per-head s/p + head_out
    proj_f32 = bt * C_pad * 4
    return int(1.25 * (weights + io + concat + qkv_f32 + attn + proj_f32))


def _pick_block_b(B, T, C, C_pad, head_size):
    """Largest divisor of B that fits the generation-aware VMEM budget."""
    vmem_cap = _tpu_vmem_capacity_bytes()
    budget = (vmem_cap * 3) // 4                     # headroom for compiler temporaries
    two_tc = vmem_cap <= 64 * 1024 * 1024            # 64 MiB/TC => v7x (2 TensorCores)

    divisors = [d for d in range(1, B + 1) if B % d == 0]
    fitting = [d for d in divisors
               if _vmem_bytes_estimate(d, T, C, C_pad, head_size) <= budget]
    if not fitting:
        fitting = [1]

    if two_tc and B > 1:
        # Prefer an even number of grid steps so neither TensorCore idles on a tail step.
        even = [d for d in fitting if (B // d) % 2 == 0]
        block_b = max(even) if even else max(fitting)
    else:
        # Single TensorCore (v5e/v6e): grid is a serial loop; biggest block that fits.
        block_b = max(fitting)
    return block_b, budget


def multi_head_attention(x, wq, wk, wv, wp, bp, *, block_b=None):
    """x: (B, T, C); wq/wk/wv: (n_heads, C, head_size) in (in, out) layout;
    wp: (C, C) in (in, out) layout; bp: (C,)."""
    B, T, C = x.shape
    n_heads, C_in, head_size = wq.shape
    assert C_in == C and n_heads * head_size == C
    assert T % 8 == 0, "T must be a multiple of 8 (pad the sequence in the caller)"

    # --- wrapper-side weight packing (runs once in XLA) ---
    scale = 1.0 / (head_size ** 0.5)
    wq_f = jnp.transpose(wq * scale, (1, 0, 2)).reshape(C, n_heads * head_size)
    wk_f = jnp.transpose(wk, (1, 0, 2)).reshape(C, n_heads * head_size)
    wv_f = jnp.transpose(wv, (1, 0, 2)).reshape(C, n_heads * head_size)
    wqkv = jnp.concatenate([wq_f, wk_f, wv_f], axis=-1).astype(jnp.bfloat16)   # (C, 3C)

    # Lane-dense output: pad projection output dim up to a multiple of 128.
    C_pad = ((C + 127) // 128) * 128
    wp_p = jnp.zeros((C, C_pad), jnp.float32).at[:, :C].set(wp).astype(jnp.bfloat16)
    bp_p = jnp.zeros((1, C_pad), jnp.float32).at[0, :C].set(bp)                # f32 bias

    x_bf = x.astype(jnp.bfloat16)

    auto_block_b, budget = _pick_block_b(B, T, C, C_pad, head_size)
    if block_b is None:
        block_b = auto_block_b
    assert B % block_b == 0
    grid = (B // block_b,)

    flops = (2 * B * T * C * (3 * C)      # fused QKV projection
             + 4 * B * T * T * C          # scores + p@v over all heads
             + 2 * B * T * C * C_pad)     # output projection
    transcendentals = B * n_heads * T * T + B * n_heads * T
    bytes_accessed = (x_bf.size * 2 + wqkv.size * 2 + wp_p.size * 2 + bp_p.size * 4
                      + B * T * C_pad * x.dtype.itemsize)

    kernel = functools.partial(mha_kernel, n_heads=n_heads, head_size=head_size)

    out = pl.pallas_call(
        kernel,
        out_shape=jax.ShapeDtypeStruct((B, T, C_pad), x.dtype),
        grid=grid,
        in_specs=[
            pl.BlockSpec((block_b, T, C), lambda b: (b, 0, 0)),
            pl.BlockSpec((C, 3 * C), lambda b: (0, 0)),
            pl.BlockSpec((C, C_pad), lambda b: (0, 0)),
            pl.BlockSpec((1, C_pad), lambda b: (0, 0)),
        ],
        out_specs=pl.BlockSpec((block_b, T, C_pad), lambda b: (b, 0, 0)),
        scratch_shapes=[pltpu.VMEM((block_b * T, C), jnp.bfloat16)],   # head-concat buffer
        compiler_params=pltpu.CompilerParams(
            dimension_semantics=("parallel",),
            vmem_limit_bytes=int(budget)),
        cost_estimate=pl.CostEstimate(flops=flops,
                                      transcendentals=transcendentals,
                                      bytes_accessed=int(bytes_accessed)),
    )(x_bf, wqkv, wp_p, bp_p)

    return out[:, :, :C]


def reference_mha(x, wq, wk, wv, wp, bp):
    """Plain-JAX reference mirroring the PyTorch forward (eval mode)."""
    B, T, C = x.shape
    n_heads, _, head_size = wq.shape
    scale = 1.0 / (head_size ** 0.5)
    mask = jnp.tril(jnp.ones((T, T), dtype=bool))
    outs = []
    for h in range(n_heads):
        q = x @ wq[h]
        k = x @ wk[h]
        v = x @ wv[h]
        s = (q @ jnp.swapaxes(k, -1, -2)) * scale
        s = jnp.where(mask[None], s, -jnp.inf)
        p = jax.nn.softmax(s, axis=-1)
        outs.append(p @ v)
    concat = jnp.concatenate(outs, axis=-1)
    return concat @ wp + bp


if __name__ == "__main__":
    # Small shapes consistent with the module: embed_size = n_heads * head_size
    B, T = 2, 8
    n_heads, head_size = 4, 8
    C = n_heads * head_size            # embed_size = 32

    key = jax.random.PRNGKey(0)
    kx, kq, kk, kv, kp, kb = jax.random.split(key, 6)

    x = jax.random.normal(kx, (B, T, C), dtype=jnp.float32)
    # per-head Linear(embed_size, head_size, bias=False) weights, (in, out) layout
    wq = jax.random.normal(kq, (n_heads, C, head_size), dtype=jnp.float32) * 0.1
    wk = jax.random.normal(kk, (n_heads, C, head_size), dtype=jnp.float32) * 0.1
    wv = jax.random.normal(kv, (n_heads, C, head_size), dtype=jnp.float32) * 0.1
    # projection Linear(embed_size, embed_size), (in, out) layout + bias
    wp = jax.random.normal(kp, (C, C), dtype=jnp.float32) * 0.1
    bp = jax.random.normal(kb, (C,), dtype=jnp.float32) * 0.1

    out = multi_head_attention(x, wq, wk, wv, wp, bp)
    out = jax.block_until_ready(out)

    ref = reference_mha(x, wq, wk, wv, wp, bp)
    assert out.shape == (B, T, C)
    # bf16 MXU operands (f32 accumulation) + approx reciprocal in the softmax ->
    # looser tolerance than exact f32.
    assert jnp.allclose(out, ref, atol=3e-2, rtol=3e-2), "mismatch vs reference"

    print("KERNEL_OK")
</pallas_src>

<mosaic_0001>
module attributes {stable_mosaic.version = 11 : i64} {
  func.func @mha_kernel(%arg0: i32, %arg1: memref<1x8x32xbf16, #tpu.memory_space<vmem>>, %arg2: memref<32x96xbf16, #tpu.memory_space<vmem>>, %arg3: memref<32x128xbf16, #tpu.memory_space<vmem>>, %arg4: memref<1x128xf32, #tpu.memory_space<vmem>>, %arg5: memref<1x8x128xf32, #tpu.memory_space<vmem>>, %arg6: memref<8x32xbf16, #tpu.memory_space<vmem>>) attributes {dimension_semantics = [#tpu.dimension_semantics<parallel>], iteration_bounds = array<i64: 2>, scalar_prefetch = 0 : i64, scratch_operands = 1 : i64, tpu.core_type = #tpu.core_type<tc>, window_params = [{transform_indices = @transform_0, window_bounds = array<i64: 1, 8, 32>}, {pipeline_mode = #tpu.pipeline_mode<synchronous>, transform_indices = @transform_1, window_bounds = array<i64: 32, 96>}, {pipeline_mode = #tpu.pipeline_mode<synchronous>, transform_indices = @transform_2, window_bounds = array<i64: 32, 128>}, {pipeline_mode = #tpu.pipeline_mode<synchronous>, transform_indices = @transform_3, window_bounds = array<i64: 1, 128>}, {transform_indices = @transform_4, window_bounds = array<i64: 1, 8, 128>}]} {
    %c0 = arith.constant 0 : index
    %c0_0 = arith.constant 0 : index
    %c0_1 = arith.constant 0 : index
    %0 = vector.load %arg1[%c0, %c0_0, %c0_1] : memref<1x8x32xbf16, #tpu.memory_space<vmem>>, vector<1x8x32xbf16>
    %1 = vector.shape_cast %0 : vector<1x8x32xbf16> to vector<8x32xbf16>
    %c0_2 = arith.constant 0 : index
    %c0_3 = arith.constant 0 : index
    %2 = vector.load %arg2[%c0_2, %c0_3] : memref<32x96xbf16, #tpu.memory_space<vmem>>, vector<32x96xbf16>
    %cst = arith.constant dense<0.000000e+00> : vector<8x96xf32>
    %3 = tpu.matmul %1, %2, %cst {dimension_numbers = #tpu.dot_dimension_numbers<[1], [0], [0], [1], [0, 0, 1, 1], [], []>} : vector<8x32xbf16>, vector<32x96xbf16>, vector<8x96xf32> -> vector<8x96xf32>
    %4 = vector.shape_cast %3 : vector<8x96xf32> to vector<1x8x96xf32>
    %5 = arith.truncf %4 : vector<1x8x96xf32> to vector<1x8x96xbf16>
    %6 = tpu.iota {dimensions = array<i32: 0>} : vector<8x8xi32>
    %7 = tpu.iota {dimensions = array<i32: 1>} : vector<8x8xi32>
    %8 = arith.cmpi sge, %6, %7 : vector<8x8xi32>
    %9 = vector.shape_cast %8 : vector<8x8xi1> to vector<1x8x8xi1>
    %10 = vector.extract_strided_slice %5 {offsets = [0, 0, 0], sizes = [1, 8, 8], strides = [1, 1, 1]} : vector<1x8x96xbf16> to vector<1x8x8xbf16>
    %11 = vector.extract_strided_slice %5 {offsets = [0, 0, 32], sizes = [1, 8, 8], strides = [1, 1, 1]} : vector<1x8x96xbf16> to vector<1x8x8xbf16>
    %12 = vector.extract_strided_slice %5 {offsets = [0, 0, 64], sizes = [1, 8, 8], strides = [1, 1, 1]} : vector<1x8x96xbf16> to vector<1x8x8xbf16>
    "tpu.trace_start"() <{level = 10 : i32, message = "btd,bsd->bts"}> : () -> ()
    %cst_4 = arith.constant dense<0.000000e+00> : vector<1x8x8xf32>
    %13 = tpu.matmul %10, %11, %cst_4 {dimension_numbers = #tpu.dot_dimension_numbers<[2], [2], [1], [1], [0, 0, 0, 1, 1, 1], [0], [0]>} : vector<1x8x8xbf16>, vector<1x8x8xbf16>, vector<1x8x8xf32> -> vector<1x8x8xf32>
    %cst_5 = arith.constant -1.000000e+30 : f32
    "tpu.trace_stop"() : () -> ()
    %14 = vector.broadcast %cst_5 : f32 to vector<1x8x8xf32>
    %15 = arith.select %9, %13, %14 : vector<1x8x8xi1>, vector<1x8x8xf32>
    %cst_6 = arith.constant dense<0xFF800000> : vector<1x8xf32>
    %16 = vector.multi_reduction <maximumf>, %15, %cst_6 [2] : vector<1x8x8xf32> to vector<1x8xf32>
    %17 = vector.shape_cast %16 : vector<1x8xf32> to vector<1x8x1xf32>
    %18 = vector.broadcast %17 : vector<1x8x1xf32> to vector<1x8x8xf32>
    %19 = arith.subf %15, %18 : vector<1x8x8xf32>
    %20 = math.exp %19 : vector<1x8x8xf32>
    %cst_7 = arith.constant dense<0.000000e+00> : vector<1x8xf32>
    %21 = vector.multi_reduction <add>, %20, %cst_7 [2] : vector<1x8x8xf32> to vector<1x8xf32>
    %22 = vector.shape_cast %21 : vector<1x8xf32> to vector<1x8x1xf32>
    %23 = tpu.reciprocal %22 {approx = true} : vector<1x8x1xf32> -> vector<1x8x1xf32>
    %24 = vector.broadcast %23 : vector<1x8x1xf32> to vector<1x8x8xf32>
    %25 = arith.mulf %20, %24 : vector<1x8x8xf32>
    %26 = arith.truncf %25 : vector<1x8x8xf32> to vector<1x8x8xbf16>
    "tpu.trace_start"() <{level = 10 : i32, message = "bts,bsd->btd"}> : () -> ()
    %cst_8 = arith.constant dense<0.000000e+00> : vector<1x8x8xf32>
    %27 = tpu.matmul %26, %12, %cst_8 {dimension_numbers = #tpu.dot_dimension_numbers<[2], [1], [1], [2], [0, 0, 0, 1, 1, 2], [0], [0]>} : vector<1x8x8xbf16>, vector<1x8x8xbf16>, vector<1x8x8xf32> -> vector<1x8x8xf32>
    "tpu.trace_stop"() : () -> ()
    %28 = vector.shape_cast %27 : vector<1x8x8xf32> to vector<8x8xf32>
    %29 = arith.truncf %28 : vector<8x8xf32> to vector<8x8xbf16>
    %c0_9 = arith.constant 0 : index
    %c0_10 = arith.constant 0 : index
    %30 = vector.load %arg6[%c0_9, %c0_10] : memref<8x32xbf16, #tpu.memory_space<vmem>>, vector<8x8xbf16>
    tpu.vector_store %arg6[%c0_9, %c0_10], %29 {strides = array<i32>} : memref<8x32xbf16, #tpu.memory_space<vmem>>, vector<8x8xbf16>,
    %31 = vector.extract_strided_slice %5 {offsets = [0, 0, 8], sizes = [1, 8, 8], strides = [1, 1, 1]} : vector<1x8x96xbf16> to vector<1x8x8xbf16>
    %32 = vector.extract_strided_slice %5 {offsets = [0, 0, 40], sizes = [1, 8, 8], strides = [1, 1, 1]} : vector<1x8x96xbf16> to vector<1x8x8xbf16>
    %33 = vector.extract_strided_slice %5 {offsets = [0, 0, 72], sizes = [1, 8, 8], strides = [1, 1, 1]} : vector<1x8x96xbf16> to vector<1x8x8xbf16>
    "tpu.trace_start"() <{level = 10 : i32, message = "btd,bsd->bts"}> : () -> ()
    %cst_11 = arith.constant dense<0.000000e+00> : vector<1x8x8xf32>
    %34 = tpu.matmul %31, %32, %cst_11 {dimension_numbers = #tpu.dot_dimension_numbers<[2], [2], [1], [1], [0, 0, 0, 1, 1, 1], [0], [0]>} : vector<1x8x8xbf16>, vector<1x8x8xbf16>, vector<1x8x8xf32> -> vector<1x8x8xf32>
    %cst_12 = arith.constant -1.000000e+30 : f32
    "tpu.trace_stop"() : () -> ()
    %35 = vector.broadcast %cst_12 : f32 to vector<1x8x8xf32>
    %36 = arith.select %9, %34, %35 : vector<1x8x8xi1>, vector<1x8x8xf32>
    %cst_13 = arith.constant dense<0xFF800000> : vector<1x8xf32>
    %37 = vector.multi_reduction <maximumf>, %36, %cst_13 [2] : vector<1x8x8xf32> to vector<1x8xf32>
    %38 = vector.shape_cast %37 : vector<1x8xf32> to vector<1x8x1xf32>
    %39 = vector.broadcast %38 : vector<1x8x1xf32> to vector<1x8x8xf32>
    %40 = arith.subf %36, %39 : vector<1x8x8xf32>
    %41 = math.exp %40 : vector<1x8x8xf32>
    %cst_14 = arith.constant dense<0.000000e+00> : vector<1x8xf32>
    %42 = vector.multi_reduction <add>, %41, %cst_14 [2] : vector<1x8x8xf32> to vector<1x8xf32>
    %43 = vector.shape_cast %42 : vector<1x8xf32> to vector<1x8x1xf32>
    %44 = tpu.reciprocal %43 {approx = true} : vector<1x8x1xf32> -> vector<1x8x1xf32>
    %45 = vector.broadcast %44 : vector<1x8x1xf32> to vector<1x8x8xf32>
    %46 = arith.mulf %41, %45 : vector<1x8x8xf32>
    %47 = arith.truncf %46 : vector<1x8x8xf32> to vector<1x8x8xbf16>
    "tpu.trace_start"() <{level = 10 : i32, message = "bts,bsd->btd"}> : () -> ()
    %cst_15 = arith.constant dense<0.000000e+00> : vector<1x8x8xf32>
    %48 = tpu.matmul %47, %33, %cst_15 {dimension_numbers = #tpu.dot_dimension_numbers<[2], [1], [1], [2], [0, 0, 0, 1, 1, 2], [0], [0]>} : vector<1x8x8xbf16>, vector<1x8x8xbf16>, vector<1x8x8xf32> -> vector<1x8x8xf32>
    "tpu.trace_stop"() : () -> ()
    %49 = vector.shape_cast %48 : vector<1x8x8xf32> to vector<8x8xf32>
    %50 = arith.truncf %49 : vector<8x8xf32> to vector<8x8xbf16>
    %c0_16 = arith.constant 0 : index
    %c8 = arith.constant 8 : index
    %51 = vector.load %arg6[%c0_16, %c8] : memref<8x32xbf16, #tpu.memory_space<vmem>>, vector<8x8xbf16>
    tpu.vector_store %arg6[%c0_16, %c8], %50 {strides = array<i32>} : memref<8x32xbf16, #tpu.memory_space<vmem>>, vector<8x8xbf16>,
    %52 = vector.extract_strided_slice %5 {offsets = [0, 0, 16], sizes = [1, 8, 8], strides = [1, 1, 1]} : vector<1x8x96xbf16> to vector<1x8x8xbf16>
    %53 = vector.extract_strided_slice %5 {offsets = [0, 0, 48], sizes = [1, 8, 8], strides = [1, 1, 1]} : vector<1x8x96xbf16> to vector<1x8x8xbf16>
    %54 = vector.extract_strided_slice %5 {offsets = [0, 0, 80], sizes = [1, 8, 8], strides = [1, 1, 1]} : vector<1x8x96xbf16> to vector<1x8x8xbf16>
    "tpu.trace_start"() <{level = 10 : i32, message = "btd,bsd->bts"}> : () -> ()
    %cst_17 = arith.constant dense<0.000000e+00> : vector<1x8x8xf32>
    %55 = tpu.matmul %52, %53, %cst_17 {dimension_numbers = #tpu.dot_dimension_numbers<[2], [2], [1], [1], [0, 0, 0, 1, 1, 1], [0], [0]>} : vector<1x8x8xbf16>, vector<1x8x8xbf16>, vector<1x8x8xf32> -> vector<1x8x8xf32>
    %cst_18 = arith.constant -1.000000e+30 : f32
    "tpu.trace_stop"() : () -> ()
    %56 = vector.broadcast %cst_18 : f32 to vector<1x8x8xf32>
    %57 = arith.select %9, %55, %56 : vector<1x8x8xi1>, vector<1x8x8xf32>
    %cst_19 = arith.constant dense<0xFF800000> : vector<1x8xf32>
    %58 = vector.multi_reduction <maximumf>, %57, %cst_19 [2] : vector<1x8x8xf32> to vector<1x8xf32>
    %59 = vector.shape_cast %58 : vector<1x8xf32> to vector<1x8x1xf32>
    %60 = vector.broadcast %59 : vector<1x8x1xf32> to vector<1x8x8xf32>
    %61 = arith.subf %57, %60 : vector<1x8x8xf32>
    %62 = math.exp %61 : vector<1x8x8xf32>
    %cst_20 = arith.constant dense<0.000000e+00> : vector<1x8xf32>
    %63 = vector.multi_reduction <add>, %62, %cst_20 [2] : vector<1x8x8xf32> to vector<1x8xf32>
    %64 = vector.shape_cast %63 : vector<1x8xf32> to vector<1x8x1xf32>
    %65 = tpu.reciprocal %64 {approx = true} : vector<1x8x1xf32> -> vector<1x8x1xf32>
    %66 = vector.broadcast %65 : vector<1x8x1xf32> to vector<1x8x8xf32>
    %67 = arith.mulf %62, %66 : vector<1x8x8xf32>
    %68 = arith.truncf %67 : vector<1x8x8xf32> to vector<1x8x8xbf16>
    "tpu.trace_start"() <{level = 10 : i32, message = "bts,bsd->btd"}> : () -> ()
    %cst_21 = arith.constant dense<0.000000e+00> : vector<1x8x8xf32>
    %69 = tpu.matmul %68, %54, %cst_21 {dimension_numbers = #tpu.dot_dimension_numbers<[2], [1], [1], [2], [0, 0, 0, 1, 1, 2], [0], [0]>} : vector<1x8x8xbf16>, vector<1x8x8xbf16>, vector<1x8x8xf32> -> vector<1x8x8xf32>
    "tpu.trace_stop"() : () -> ()
    %70 = vector.shape_cast %69 : vector<1x8x8xf32> to vector<8x8xf32>
    %71 = arith.truncf %70 : vector<8x8xf32> to vector<8x8xbf16>
    %c0_22 = arith.constant 0 : index
    %c16 = arith.constant 16 : index
    %72 = vector.load %arg6[%c0_22, %c16] : memref<8x32xbf16, #tpu.memory_space<vmem>>, vector<8x8xbf16>
    tpu.vector_store %arg6[%c0_22, %c16], %71 {strides = array<i32>} : memref<8x32xbf16, #tpu.memory_space<vmem>>, vector<8x8xbf16>,
    %73 = vector.extract_strided_slice %5 {offsets = [0, 0, 24], sizes = [1, 8, 8], strides = [1, 1, 1]} : vector<1x8x96xbf16> to vector<1x8x8xbf16>
    %74 = vector.extract_strided_slice %5 {offsets = [0, 0, 56], sizes = [1, 8, 8], strides = [1, 1, 1]} : vector<1x8x96xbf16> to vector<1x8x8xbf16>
    %75 = vector.extract_strided_slice %5 {offsets = [0, 0, 88], sizes = [1, 8, 8], strides = [1, 1, 1]} : vector<1x8x96xbf16> to vector<1x8x8xbf16>
    "tpu.trace_start"() <{level = 10 : i32, message = "btd,bsd->bts"}> : () -> ()
    %cst_23 = arith.constant dense<0.000000e+00> : vector<1x8x8xf32>
    %76 = tpu.matmul %73, %74, %cst_23 {dimension_numbers = #tpu.dot_dimension_numbers<[2], [2], [1], [1], [0, 0, 0, 1, 1, 1], [0], [0]>} : vector<1x8x8xbf16>, vector<1x8x8xbf16>, vector<1x8x8xf32> -> vector<1x8x8xf32>
    %cst_24 = arith.constant -1.000000e+30 : f32
    "tpu.trace_stop"() : () -> ()
    %77 = vector.broadcast %cst_24 : f32 to vector<1x8x8xf32>
    %78 = arith.select %9, %76, %77 : vector<1x8x8xi1>, vector<1x8x8xf32>
    %cst_25 = arith.constant dense<0xFF800000> : vector<1x8xf32>
    %79 = vector.multi_reduction <maximumf>, %78, %cst_25 [2] : vector<1x8x8xf32> to vector<1x8xf32>
    %80 = vector.shape_cast %79 : vector<1x8xf32> to vector<1x8x1xf32>
    %81 = vector.broadcast %80 : vector<1x8x1xf32> to vector<1x8x8xf32>
    %82 = arith.subf %78, %81 : vector<1x8x8xf32>
    %83 = math.exp %82 : vector<1x8x8xf32>
    %cst_26 = arith.constant dense<0.000000e+00> : vector<1x8xf32>
    %84 = vector.multi_reduction <add>, %83, %cst_26 [2] : vector<1x8x8xf32> to vector<1x8xf32>
    %85 = vector.shape_cast %84 : vector<1x8xf32> to vector<1x8x1xf32>
    %86 = tpu.reciprocal %85 {approx = true} : vector<1x8x1xf32> -> vector<1x8x1xf32>
    %87 = vector.broadcast %86 : vector<1x8x1xf32> to vector<1x8x8xf32>
    %88 = arith.mulf %83, %87 : vector<1x8x8xf32>
    %89 = arith.truncf %88 : vector<1x8x8xf32> to vector<1x8x8xbf16>
    "tpu.trace_start"() <{level = 10 : i32, message = "bts,bsd->btd"}> : () -> ()
    %cst_27 = arith.constant dense<0.000000e+00> : vector<1x8x8xf32>
    %90 = tpu.matmul %89, %75, %cst_27 {dimension_numbers = #tpu.dot_dimension_numbers<[2], [1], [1], [2], [0, 0, 0, 1, 1, 2], [0], [0]>} : vector<1x8x8xbf16>, vector<1x8x8xbf16>, vector<1x8x8xf32> -> vector<1x8x8xf32>
    "tpu.trace_stop"() : () -> ()
    %91 = vector.shape_cast %90 : vector<1x8x8xf32> to vector<8x8xf32>
    %92 = arith.truncf %91 : vector<8x8xf32> to vector<8x8xbf16>
    %c0_28 = arith.constant 0 : index
    %c24 = arith.constant 24 : index
    %93 = vector.load %arg6[%c0_28, %c24] : memref<8x32xbf16, #tpu.memory_space<vmem>>, vector<8x8xbf16>
    tpu.vector_store %arg6[%c0_28, %c24], %92 {strides = array<i32>} : memref<8x32xbf16, #tpu.memory_space<vmem>>, vector<8x8xbf16>,
    %c0_29 = arith.constant 0 : index
    %c0_30 = arith.constant 0 : index
    %94 = vector.load %arg6[%c0_29, %c0_30] : memref<8x32xbf16, #tpu.memory_space<vmem>>, vector<8x32xbf16>
    %c0_31 = arith.constant 0 : index
    %c0_32 = arith.constant 0 : index
    %95 = vector.load %arg3[%c0_31, %c0_32] : memref<32x128xbf16, #tpu.memory_space<vmem>>, vector<32x128xbf16>
    %cst_33 = arith.constant dense<0.000000e+00> : vector<8x128xf32>
    %96 = tpu.matmul %94, %95, %cst_33 {dimension_numbers = #tpu.dot_dimension_numbers<[1], [0], [0], [1], [0, 0, 1, 1], [], []>} : vector<8x32xbf16>, vector<32x128xbf16>, vector<8x128xf32> -> vector<8x128xf32>
    %c0_34 = arith.constant 0 : index
    %c0_35 = arith.constant 0 : index
    %97 = vector.load %arg4[%c0_34, %c0_35] : memref<1x128xf32, #tpu.memory_space<vmem>>, vector<1x128xf32>
    %98 = vector.broadcast %97 : vector<1x128xf32> to vector<8x128xf32>
    %99 = arith.addf %96, %98 : vector<8x128xf32>
    %100 = vector.shape_cast %99 : vector<8x128xf32> to vector<1x8x128xf32>
    %c0_36 = arith.constant 0 : index
    %c0_37 = arith.constant 0 : index
    %c0_38 = arith.constant 0 : index
    %101 = vector.load %arg5[%c0_36, %c0_37, %c0_38] : memref<1x8x128xf32, #tpu.memory_space<vmem>>, vector<1x8x128xf32>
    tpu.vector_store %arg5[%c0_36, %c0_37, %c0_38], %100 {strides = array<i32>} : memref<1x8x128xf32, #tpu.memory_space<vmem>>, vector<1x8x128xf32>,
    return
  }
  func.func @transform_0(%arg0: i32) -> (i32, i32, i32) {
    %c0_i32 = arith.constant 0 : i32
    %c0_i32_0 = arith.constant 0 : i32
    %c0_i32_1 = arith.constant 0 : i32
    return %arg0, %c0_i32, %c0_i32_0 : i32, i32, i32
  }
  func.func @transform_1(%arg0: i32) -> (i32, i32) {
    %c0_i32 = arith.constant 0 : i32
    %c0_i32_0 = arith.constant 0 : i32
    %c0_i32_1 = arith.constant 0 : i32
    return %c0_i32, %c0_i32_0 : i32, i32
  }
  func.func @transform_2(%arg0: i32) -> (i32, i32) {
    %c0_i32 = arith.constant 0 : i32
    %c0_i32_0 = arith.constant 0 : i32
    %c0_i32_1 = arith.constant 0 : i32
    return %c0_i32, %c0_i32_0 : i32, i32
  }
  func.func @transform_3(%arg0: i32) -> (i32, i32) {
    %c0_i32 = arith.constant 0 : i32
    %c0_i32_0 = arith.constant 0 : i32
    %c0_i32_1 = arith.constant 0 : i32
    return %c0_i32, %c0_i32_0 : i32, i32
  }
  func.func @transform_4(%arg0: i32) -> (i32, i32, i32) {
    %c0_i32 = arith.constant 0 : i32
    %c0_i32_0 = arith.constant 0 : i32
    %c0_i32_1 = arith.constant 0 : i32
    return %arg0, %c0_i32, %c0_i32_0 : i32, i32, i32
  }
}

</mosaic_0001>

<llo_original>
// kernel: tpu_custom_call.1
$region0: #{tpu_custom_call.1}
  #allocation0 [shape = 'u32[]', space=smem, size = 0x4, offset = 0x4, fixed_abs, tag = 'smem constant byte address 0x4 - core index']
  #allocation1 [shape = 'u32[72,128]{1,0:T(1,128)}', space=vmem, size = 0x9000, scoped, tag = 'internal scratch']
  #allocation2 [shape = 'bf16[8,32]{1,0:T(8,128)(2,1)}', space=vmem, size = 0x800, scoped, tag = 'scratch operand']
  %s0 = inlined_call_operand.hbm [shape: bf16[2,8,32], index: 0, kind: input, shape index: {}]
  %s1 = inlined_call_operand.hbm [shape: bf16[32,96], index: 1, kind: input, shape index: {}]
  %s2 = inlined_call_operand.hbm [shape: bf16[32,128], index: 2, kind: input, shape index: {}]
  %s3 = inlined_call_operand.vmem [shape: f32[1,128], index: 3, kind: input, shape index: {}]
  %s4 = inlined_call_operand.hbm [shape: f32[2,8,128], index: 4, kind: output, shape index: {}]
  %s5 = sld [smem:[#allocation0]]
  $region61: #{tpu_custom_call.1} parent=0
    _
  %s7 = ssub.s32 1, %s5
  %s8 = scalar_select 0, %s7, %s5
  $region1: #{tpu_custom_call.1} parent=0
    #allocation3 [shape = 'u8[4096]{0}', space=vmem, size = 0x1000, scoped, tag = 'input window, operand 0']
    #allocation4 [shape = 's32[2]{0}', space=sflag, size = 0x8, scoped, tag = 'scoped memory for tpu_custom_call.1']
    #allocation5 [shape = 's32[2]{0}', space=sflag, size = 0x8, scoped, tag = 'scoped memory for tpu_custom_call.1']
    #allocation6 [shape = 'u8[8192]{0}', space=vmem, size = 0x2000, scoped, tag = 'input window, operand 1, single buffered']
    #allocation7 [shape = 's32[1]{0}', space=sflag, size = 0x4, scoped, tag = 'scoped memory for tpu_custom_call.1']
    #allocation8 [shape = 'u8[8192]{0}', space=vmem, size = 0x2000, scoped, tag = 'input window, operand 2, single buffered']
    #allocation9 [shape = 'u8[8192]{0}', space=vmem, size = 0x2000, scoped, tag = 'output window, operand 0']
    %9 = vsyncpa [#allocation4], 0
    %s10 = scalar_lea.sflag [#allocation4], 1
    %11 = vsyncpa %s10, 0
    %12 = vsyncpa [#allocation7], 0
    %13 = vsyncpa [#allocation5], 0
    %s14 = scalar_lea.sflag [#allocation5], 1
    %15 = vsyncpa %s14, 0
    loop: start=0, step=1, limit=4
    $region2: #{tpu_custom_call.1} parent=1 // loop_pre_header
      _
    $region3: #{tpu_custom_call.1} parent=1 // loop_header
      %s17 = sphi 0, %s21
      %p18 = scmp.ge.s32.totalorder %s17, 4
      %s27 = sphi 0, %s29
      %s30 = sphi 0, %s27
      %s31 = sphi 0, %s30
      %s47 = sphi 0, %s31
      %s51 = sphi 0, %s51
      %s53 = sphi 0, %s51
      %s54 = sphi 0, %s53
      %s68 = sphi 0, %s54
      %s72 = sphi 0, %s72
      %s74 = sphi 0, %s72
      %s75 = sphi 0, %s74
      %s89 = sphi 0, %s75
      %s93 = sphi 0, %s93
      %s95 = sphi 0, %s93
      %s96 = sphi 0, %s95
      %s110 = sphi 0, %s96
      %s116 = sphi 0, %s118
      %s119 = sphi 0, %s116
      %s120 = sphi 0, %s119
      %s136 = sphi 0, %s120
    $region4: #{tpu_custom_call.1} parent=1 // loop_header_branch
      %20 = sbr.rel (%p18) target = $region8
    $region5: #{tpu_custom_call.1} parent=1 // loop_body
      %s22 = ssub.s32 %s17, 1
      %s23 = ssub.s32 %s17, 2
      %s24 = sadd.s32 %s17, 1
      %s25 = ssub.s32 %s17, %s24
      %p26 = scmp.eq.s32.totalorder %s25, 0
      %s28 = sadd.s32 %s27, 1
      %s29 = scalar_select %p26, %s27, %s28
      %p32 = pneg %p26
      %p33 = scmp.eq.s32.totalorder %s17, 1
      %p34 = por %p32, %p33
      %p35 = scmp.ne.s32.totalorder %s27, %s30
      %p36 = scmp.eq.s32.totalorder %s17, 0
      %p37 = por %p35, %p36
      %p38 = scmp.ne.s32.totalorder %s27, %s30
      %p39 = scmp.eq.s32.totalorder %s22, 1
      %p40 = por %p38, %p39
      %p41 = scmp.ne.s32.totalorder %s30, %s31
      %p42 = scmp.eq.s32.totalorder %s22, 0
      %p43 = por %p41, %p42
      %p44 = scmp.ne.s32.totalorder %s30, %s31
      %p45 = scmp.eq.s32.totalorder %s23, 1
      %p46 = por %p44, %p45
      %p48 = scmp.ne.s32.totalorder %s31, %s47
      %p49 = scmp.eq.s32.totalorder %s23, 0
      %p50 = por %p48, %p49
      %s52 = sadd.s32 %s51, 1
      %p55 = scmp.eq.s32.totalorder %s17, 1
      %p56 = scmp.ne.s32.totalorder %s51, %s53
      %p57 = scmp.eq.s32.totalorder %s17, 0
      %p58 = por %p56, %p57
      %p59 = scmp.ne.s32.totalorder %s51, %s53
      %p60 = scmp.eq.s32.totalorder %s22, 1
      %p61 = por %p59, %p60
      %p62 = scmp.ne.s32.totalorder %s53, %s54
      %p63 = scmp.eq.s32.totalorder %s22, 0
      %p64 = por %p62, %p63
      %p65 = scmp.ne.s32.totalorder %s53, %s54
      %p66 = scmp.eq.s32.totalorder %s23, 1
      %p67 = por %p65, %p66
      %p69 = scmp.ne.s32.totalorder %s54, %s68
      %p70 = scmp.eq.s32.totalorder %s23, 0
      %p71 = por %p69, %p70
      %s73 = sadd.s32 %s72, 1
      %p76 = scmp.eq.s32.totalorder %s17, 1
      %p77 = scmp.ne.s32.totalorder %s72, %s74
      %p78 = scmp.eq.s32.totalorder %s17, 0
      %p79 = por %p77, %p78
      %p80 = scmp.ne.s32.totalorder %s72, %s74
      %p81 = scmp.eq.s32.totalorder %s22, 1
      %p82 = por %p80, %p81
      %p83 = scmp.ne.s32.totalorder %s74, %s75
      %p84 = scmp.eq.s32.totalorder %s22, 0
      %p85 = por %p83, %p84
      %p86 = scmp.ne.s32.totalorder %s74, %s75
      %p87 = scmp.eq.s32.totalorder %s23, 1
      %p88 = por %p86, %p87
      %p90 = scmp.ne.s32.totalorder %s75, %s89
      %p91 = scmp.eq.s32.totalorder %s23, 0
      %p92 = por %p90, %p91
      %s94 = sadd.s32 %s93, 1
      %p97 = scmp.eq.s32.totalorder %s17, 1
      %p98 = scmp.ne.s32.totalorder %s93, %s95
      %p99 = scmp.eq.s32.totalorder %s17, 0
      %p100 = por %p98, %p99
      %p101 = scmp.ne.s32.totalorder %s93, %s95
      %p102 = scmp.eq.s32.totalorder %s22, 1
      %p103 = por %p101, %p102
      %p104 = scmp.ne.s32.totalorder %s95, %s96
      %p105 = scmp.eq.s32.totalorder %s22, 0
      %p106 = por %p104, %p105
      %p107 = scmp.ne.s32.totalorder %s95, %s96
      %p108 = scmp.eq.s32.totalorder %s23, 1
      %p109 = por %p107, %p108
      %p111 = scmp.ne.s32.totalorder %s96, %s110
      %p112 = scmp.eq.s32.totalorder %s23, 0
      %p113 = por %p111, %p112
      %s114 = ssub.s32 %s17, %s24
      %p115 = scmp.eq.s32.totalorder %s114, 0
      %s117 = sadd.s32 %s116, 1
      %s118 = scalar_select %p115, %s116, %s117
      %p121 = pneg %p115
      %p122 = scmp.eq.s32.totalorder %s17, 1
      %p123 = por %p121, %p122
      %p124 = scmp.ne.s32.totalorder %s116, %s119
      %p125 = scmp.eq.s32.totalorder %s17, 0
      %p126 = por %p124, %p125
      %p127 = scmp.ne.s32.totalorder %s116, %s119
      %p128 = scmp.eq.s32.totalorder %s22, 1
      %p129 = por %p127, %p128
      %p130 = scmp.ne.s32.totalorder %s119, %s120
      %p131 = scmp.eq.s32.totalorder %s22, 0
      %p132 = por %p130, %p131
      %p133 = scmp.ne.s32.totalorder %s119, %s120
      %p134 = scmp.eq.s32.totalorder %s23, 1
      %p135 = por %p133, %p134
      %p137 = scmp.ne.s32.totalorder %s120, %s136
      %p138 = scmp.eq.s32.totalorder %s23, 0
      %p139 = por %p137, %p138
      %p140 = scmp.le.s32.totalorder 1, %s17
      %p141 = scmp.lt.s32.totalorder %s17, 3
      %p142 = pnand %p140, %p141
      %p143 = pneg %p142
      // Predicated region
      $region9: #{tpu_custom_call.1} parent=5 // pred_check
        _
      $region10: #{tpu_custom_call.1} parent=5 // pred_check_branch
        %145 = sbr.rel (%p142) target = $region12
      $region11: #{tpu_custom_call.1} parent=5 // pred_region
        %s146 = ssub.s32 %s17, 1
        // Predicated region
        $region13: #{tpu_custom_call.1} parent=11 // pred_check
          %p147 = pneg %p64
        $region14: #{tpu_custom_call.1} parent=11 // pred_check_branch
          %149 = sbr.rel (%p147) target = $region16
        $region15: #{tpu_custom_call.1} parent=11 // pred_region
          %151 = vsyncadd [#allocation7], 0
          %s152 = sshll.u32 %s1, 4
          %s153 = int_to_ptr.hbm [resolvable:$true] %s152
          %s154 = sshll.u32 [#allocation6], 4
          %s155 = int_to_ptr.vmem [resolvable:$true] %s154
          %160 = dma.hbm_to_vmem [thread:$0]  %s153, 256, %s155, [#allocation7], 64, 64, 4
        $region16: #{tpu_custom_call.1} parent=11 // pred_fallthru
          _
        // Predicated region
        $region17: #{tpu_custom_call.1} parent=11 // pred_check
          %p161 = pneg %p85
        $region18: #{tpu_custom_call.1} parent=11 // pred_check_branch
          %163 = sbr.rel (%p161) target = $region20
        $region19: #{tpu_custom_call.1} parent=11 // pred_region
          %165 = vsyncadd [#allocation7], 0
          %s166 = sshll.u32 %s2, 4
          %s167 = int_to_ptr.hbm [resolvable:$true] %s166
          %s168 = sshll.u32 [#allocation8], 4
          %s169 = int_to_ptr.vmem [resolvable:$true] %s168
          %174 = dma.hbm_to_vmem [thread:$0]  %s167, 256, %s169, [#allocation7], 64, 64, 4
        $region20: #{tpu_custom_call.1} parent=11 // pred_fallthru
          _
        // Predicated region
        $region21: #{tpu_custom_call.1} parent=11 // pred_check
          %p175 = pneg %p106
        $region22: #{tpu_custom_call.1} parent=11 // pred_check_branch
          %177 = sbr.rel (%p175) target = $region24
        $region23: #{tpu_custom_call.1} parent=11 // pred_region
          _
        $region24: #{tpu_custom_call.1} parent=11 // pred_fallthru
          _
      $region12: #{tpu_custom_call.1} parent=5 // pred_fallthru
        _
      %p178 = scmp.lt.s32.totalorder %s17, 2
      // Predicated region
      $region25: #{tpu_custom_call.1} parent=5 // pred_check
        %p179 = pneg %p178
      $region26: #{tpu_custom_call.1} parent=5 // pred_check_branch
        %181 = sbr.rel (%p179) target = $region28
      $region27: #{tpu_custom_call.1} parent=5 // pred_region
        // Predicated region
        $region29: #{tpu_custom_call.1} parent=27 // pred_check
          %p182 = pneg %p37
        $region30: #{tpu_custom_call.1} parent=27 // pred_check_branch
          %184 = sbr.rel (%p182) target = $region32
        $region31: #{tpu_custom_call.1} parent=27 // pred_region
          %s185 = sand.u32 %s27, 1
          %s186 = scalar_lea.sflag [#allocation4], %s185
          %s187 = sand.u32 %s27, 1
          %s188 = smul.addr %s187, 4
          %s189 = scalar_lea.vmem [#allocation3], %s188
          %191 = vsyncadd %s186, 0
          %s192 = smul.addr %s17, 4
          %s193 = scalar_lea.hbm %s0, %s192
          %s195 = sshll.u32 %s193, 4
          %s196 = int_to_ptr.hbm [resolvable:$true] %s195
          %s197 = sshll.u32 %s189, 4
          %s198 = int_to_ptr.vmem [resolvable:$true] %s197
          %200 = dma.hbm_to_vmem [thread:$0]  %s196, 64, %s198, %s186
        $region32: #{tpu_custom_call.1} parent=27 // pred_fallthru
          _
      $region28: #{tpu_custom_call.1} parent=5 // pred_fallthru
        _
      %p201 = scmp.le.s32.totalorder 1, %s17
      %p202 = scmp.lt.s32.totalorder %s17, 3
      %p203 = pnand %p201, %p202
      %p204 = pneg %p203
      // Predicated region
      $region33: #{tpu_custom_call.1} parent=5 // pred_check
        _
      $region34: #{tpu_custom_call.1} parent=5 // pred_check_branch
        %206 = sbr.rel (%p203) target = $region36
      $region35: #{tpu_custom_call.1} parent=5 // pred_region
        %s207 = ssub.s32 %s17, 1
        %s208 = sand.u32 %s30, 1
        %s209 = scalar_lea.sflag [#allocation4], %s208
        %s210 = sand.u32 %s30, 1
        %s211 = smul.addr %s210, 4
        %s212 = scalar_lea.vmem [#allocation3], %s211
        // Predicated region
        $region37: #{tpu_custom_call.1} parent=35 // pred_check
          %p213 = pneg %p43
        $region38: #{tpu_custom_call.1} parent=35 // pred_check_branch
          %215 = sbr.rel (%p213) target = $region40
        $region39: #{tpu_custom_call.1} parent=35 // pred_region
          %217 = dma.done %s209, 64
        $region40: #{tpu_custom_call.1} parent=35 // pred_fallthru
          _
        // Predicated region
        $region41: #{tpu_custom_call.1} parent=35 // pred_check
          %p218 = pneg %p64
        $region42: #{tpu_custom_call.1} parent=35 // pred_check_branch
          %220 = sbr.rel (%p218) target = $region44
        $region43: #{tpu_custom_call.1} parent=35 // pred_region
          %222 = dma.done [#allocation7], 256
        $region44: #{tpu_custom_call.1} parent=35 // pred_fallthru
          _
        // Predicated region
        $region45: #{tpu_custom_call.1} parent=35 // pred_check
          %p223 = pneg %p85
        $region46: #{tpu_custom_call.1} parent=35 // pred_check_branch
          %225 = sbr.rel (%p223) target = $region48
        $region47: #{tpu_custom_call.1} parent=35 // pred_region
          %227 = dma.done [#allocation7], 256
        $region48: #{tpu_custom_call.1} parent=35 // pred_fallthru
          _
        %s228 = sand.u32 %s30, 1
        %s229 = scalar_lea.sflag [#allocation4], %s228
        %s230 = sand.u32 %s30, 1
        %s231 = smul.addr %s230, 4
        %s232 = scalar_lea.vmem [#allocation3], %s231
        %p233 = pneg %p43
        %p234 = pneg %p40
        %p235 = pneg %p64
        %p236 = pneg %p61
        %p237 = pneg %p85
        %p238 = pneg %p82
        %p239 = pneg %p106
        %p240 = pneg %p103
        %p241 = pneg %p132
        %p242 = pneg %p129
        %s243 = sand.u32 %s119, 1
        %s244 = scalar_lea.sflag [#allocation5], %s243
        %s245 = sand.u32 %s119, 1
        %s246 = smul.addr %s245, 8
        %s247 = scalar_lea.vmem [#allocation9], %s246
        %v249 = vld [vmem:[%s212] sm:$0xf]
        %v250 = vld [vmem:[#allocation6] sm:$0xf]
        %v251 = vld [vmem:[#allocation6 + $0x4] sm:$0xf]
        %v252 = vld [vmem:[#allocation6 + $0x8] sm:$0xf]
        %v253 = vld [vmem:[#allocation6 + $0xc] sm:$0xf]
        %v258 = vunpack.c.l.b16 %v250
        %v259 = vunpack.c.l.b16 %v251
        %v260 = vunpack.c.l.b16 %v252
        %v261 = vunpack.c.l.b16 %v253
        %v262 = vpack.c.b16 %v259, %v258
        %v263 = vpack.c.b16 %v261, %v260
        %vm266 = vcmask 261120
        %v268 = vsel %vm266, %v249, 0
        %270 = vmatpush.bf16.msra.mxu0 0
        %271 = vmatpush.bf16.msra.mxu0 0
        %272 = vmatpush.bf16.msra.mxu0 0
        %273 = vmatpush.bf16.msra.mxu0 0
        %274 = vmatpush.bf16.msra.mxu0 0
        %275 = vmatpush.bf16.msra.mxu0 0
        %276 = vmatpush.bf16.msra.mxu0 %v263
        %277 = vmatpush.bf16.msra.mxu0 %v262
        %278 = vmatmul.bf16.gmra.mxu0 %v268
        %v279 = vpop.f32.mrf.mxu0
        %v280 = vadd.f32 0.0, %v279
        %v281 = vpop.f32.mrf.mxu0
        %282 = vdwg.mxu0
        %v283 = vpack.c.bf16 %v280, %v280
        %v284 = vlaneseq
        %v285 = vshrl.u32 %v284, 7
        %v286 = vlaneseq
        %v287 = vand.u32 %v286, 127
        %vm288 = vcmp.ge.s32.totalorder %v285, %v287
        %v290 = vunpack.c.l.b16 %v283
        %v291 = vpack.c.b16 %v290, %v290
        %292 = vrot.lane.b32.xlu0 %v291, 96
        %v293 = vpop.permute.xlu0 %292
        %vm294 = vcmask 64512
        %v296 = vsel %vm294, %v283, 0
        %v299 = vsel %vm294, %v293, 0
        %301 = vmatpush.bf16.xpose.msra.mxu0 0
        %302 = vmatpush.bf16.xpose.msra.mxu0 0
        %303 = vmatpush.bf16.xpose.msra.mxu0 0
        %304 = vmatpush.bf16.xpose.msra.mxu0 0
        %305 = vmatpush.bf16.xpose.msra.mxu0 0
        %306 = vmatpush.bf16.xpose.msra.mxu0 0
        %307 = vmatpush.bf16.xpose.msra.mxu0 0
        %308 = vmatpush.bf16.xpose.msra.mxu0 %v299
        %309 = vmatmul.bf16.gmra.mxu0 %v296
        %v310 = vpop.f32.mrf.mxu0
        %v311 = vadd.f32 0.0, %v310
        %v312 = vpop.f32.mrf.mxu0
        %313 = vdwg.mxu0
        %v314 = vsel %vm288, %v311, -1e+30
        %v315 = vsel %vm294, %v314, -inf
        %316 = vmax.xlane.f32.xlu0 %v315
        %v317 = vpop.xlane.xlu0 %316
        %v318 = vsub.f32 %v314, %v317
        %v319 = vmul.f32 %v318, 1.442695
        %v320 = vpow.pop %v319
        %v321 = vsel %vm294, %v320, 0.0
        %322 = vadd.xlane.f32.xlu0 %v321
        %v323 = vpop.xlane.xlu0 %322
        %v324 = vrcp.pop %v323
        %v325 = vmul.f32 %v320, %v324
        %v326 = vpack.c.bf16 %v325, %v325
        %327 = vrot.lane.b32.xlu0 %v291, 64
        %v328 = vpop.permute.xlu0 %327
        %v330 = vsel %vm294, %v326, 0
        %vm332 = vcmask 1043456
        %v334 = vsel %vm332, %v328, 0
        %336 = vmatpush.bf16.msra.mxu0 0
        %337 = vmatpush.bf16.msra.mxu0 0
        %338 = vmatpush.bf16.msra.mxu0 0
        %339 = vmatpush.bf16.msra.mxu0 0
        %340 = vmatpush.bf16.msra.mxu0 0
        %341 = vmatpush.bf16.msra.mxu0 0
        %342 = vmatpush.bf16.msra.mxu0 0
        %343 = vmatpush.bf16.msra.mxu0 %v334
        %344 = vmatmul.bf16.gmra.mxu0 %v330
        %v345 = vpop.f32.mrf.mxu0
        %v346 = vadd.f32 0.0, %v345
        %v347 = vpop.f32.mrf.mxu0
        %348 = vdwg.mxu0
        %v349 = vpack.c.bf16 %v346, %v346
        %vm350 = vcmask 60416
        %351 = vst.msk [vmem:[#allocation2] sm:$0xf] %vm350, %v349
        %352 = vrot.lane.b32.xlu0 %v291, 120
        %v353 = vpop.permute.xlu0 %352
        %354 = vrot.lane.b32.xlu0 %v291, 88
        %v355 = vpop.permute.xlu0 %354
        %v357 = vsel %vm294, %v353, 0
        %v360 = vsel %vm294, %v355, 0
        %362 = vmatpush.bf16.xpose.msra.mxu0 0
        %363 = vmatpush.bf16.xpose.msra.mxu0 0
        %364 = vmatpush.bf16.xpose.msra.mxu0 0
        %365 = vmatpush.bf16.xpose.msra.mxu0 0
        %366 = vmatpush.bf16.xpose.msra.mxu0 0
        %367 = vmatpush.bf16.xpose.msra.mxu0 0
        %368 = vmatpush.bf16.xpose.msra.mxu0 0
        %369 = vmatpush.bf16.xpose.msra.mxu0 %v360
        %370 = vmatmul.bf16.gmra.mxu0 %v357
        %v371 = vpop.f32.mrf.mxu0
        %v372 = vadd.f32 0.0, %v371
        %v373 = vpop.f32.mrf.mxu0
        %374 = vdwg.mxu0
        %v375 = vsel %vm288, %v372, -1e+30
        %v376 = vsel %vm294, %v375, -inf
        %377 = vmax.xlane.f32.xlu0 %v376
        %v378 = vpop.xlane.xlu0 %377
        %v379 = vsub.f32 %v375, %v378
        %v380 = vmul.f32 %v379, 1.442695
        %v381 = vpow.pop %v380
        %v382 = vsel %vm294, %v381, 0.0
        %383 = vadd.xlane.f32.xlu0 %v382
        %v384 = vpop.xlane.xlu0 %383
        %v385 = vrcp.pop %v384
        %v386 = vmul.f32 %v381, %v385
        %v387 = vpack.c.bf16 %v386, %v386
        %388 = vrot.lane.b32.xlu0 %v291, 56
        %v389 = vpop.permute.xlu0 %388
        %v391 = vsel %vm294, %v387, 0
        %v394 = vsel %vm332, %v389, 0
        %396 = vmatpush.bf16.msra.mxu0 0
        %397 = vmatpush.bf16.msra.mxu0 0
        %398 = vmatpush.bf16.msra.mxu0 0
        %399 = vmatpush.bf16.msra.mxu0 0
        %400 = vmatpush.bf16.msra.mxu0 0
        %401 = vmatpush.bf16.msra.mxu0 0
        %402 = vmatpush.bf16.msra.mxu0 0
        %403 = vmatpush.bf16.msra.mxu0 %v394
        %404 = vmatmul.bf16.gmra.mxu0 %v391
        %v405 = vpop.f32.mrf.mxu0
        %v406 = vadd.f32 0.0, %v405
        %v407 = vpop.f32.mrf.mxu0
        %408 = vdwg.mxu0
        %v409 = vpack.c.bf16 %v406, %v406
        %411 = vrot.lane.b32.xlu0 %v409, 8
        %v412 = vpop.permute.xlu0 %411
        %vm414 = vcmask 126016
        %415 = vst.msk [vmem:[#allocation2] sm:$0xf] %vm414, %v412
        %416 = vrot.lane.b32.xlu0 %v291, 112
        %v417 = vpop.permute.xlu0 %416
        %418 = vrot.lane.b32.xlu0 %v291, 80
        %v419 = vpop.permute.xlu0 %418
        %v421 = vsel %vm294, %v417, 0
        %v424 = vsel %vm294, %v419, 0
        %426 = vmatpush.bf16.xpose.msra.mxu0 0
        %427 = vmatpush.bf16.xpose.msra.mxu0 0
        %428 = vmatpush.bf16.xpose.msra.mxu0 0
        %429 = vmatpush.bf16.xpose.msra.mxu0 0
        %430 = vmatpush.bf16.xpose.msra.mxu0 0
        %431 = vmatpush.bf16.xpose.msra.mxu0 0
        %432 = vmatpush.bf16.xpose.msra.mxu0 0
        %433 = vmatpush.bf16.xpose.msra.mxu0 %v424
        %434 = vmatmul.bf16.gmra.mxu0 %v421
        %v435 = vpop.f32.mrf.mxu0
        %v436 = vadd.f32 0.0, %v435
        %v437 = vpop.f32.mrf.mxu0
        %438 = vdwg.mxu0
        %v439 = vsel %vm288, %v436, -1e+30
        %v440 = vsel %vm294, %v439, -inf
        %441 = vmax.xlane.f32.xlu0 %v440
        %v442 = vpop.xlane.xlu0 %441
        %v443 = vsub.f32 %v439, %v442
        %v444 = vmul.f32 %v443, 1.442695
        %v445 = vpow.pop %v444
        %v446 = vsel %vm294, %v445, 0.0
        %447 = vadd.xlane.f32.xlu0 %v446
        %v448 = vpop.xlane.xlu0 %447
        %v449 = vrcp.pop %v448
        %v450 = vmul.f32 %v445, %v449
        %v451 = vpack.c.bf16 %v450, %v450
        %452 = vrot.lane.b32.xlu0 %v291, 48
        %v453 = vpop.permute.xlu0 %452
        %v455 = vsel %vm294, %v451, 0
        %v458 = vsel %vm332, %v453, 0
        %460 = vmatpush.bf16.msra.mxu0 0
        %461 = vmatpush.bf16.msra.mxu0 0
        %462 = vmatpush.bf16.msra.mxu0 0
        %463 = vmatpush.bf16.msra.mxu0 0
        %464 = vmatpush.bf16.msra.mxu0 0
        %465 = vmatpush.bf16.msra.mxu0 0
        %466 = vmatpush.bf16.msra.mxu0 0
        %467 = vmatpush.bf16.msra.mxu0 %v458
        %468 = vmatmul.bf16.gmra.mxu0 %v455
        %v469 = vpop.f32.mrf.mxu0
        %v470 = vadd.f32 0.0, %v469
        %v471 = vpop.f32.mrf.mxu0
        %472 = vdwg.mxu0
        %v473 = vpack.c.bf16 %v470, %v470
        %475 = vrot.lane.b32.xlu0 %v473, 16
        %v476 = vpop.permute.xlu0 %475
        %vm478 = vcmask 191616
        %479 = vst.msk [vmem:[#allocation2] sm:$0xf] %vm478, %v476
        %480 = vrot.lane.b32.xlu0 %v291, 104
        %v481 = vpop.permute.xlu0 %480
        %482 = vrot.lane.b32.xlu0 %v291, 72
        %v483 = vpop.permute.xlu0 %482
        %v485 = vsel %vm294, %v481, 0
        %v488 = vsel %vm294, %v483, 0
        %490 = vmatpush.bf16.xpose.msra.mxu0 0
        %491 = vmatpush.bf16.xpose.msra.mxu0 0
        %492 = vmatpush.bf16.xpose.msra.mxu0 0
        %493 = vmatpush.bf16.xpose.msra.mxu0 0
        %494 = vmatpush.bf16.xpose.msra.mxu0 0
        %495 = vmatpush.bf16.xpose.msra.mxu0 0
        %496 = vmatpush.bf16.xpose.msra.mxu0 0
        %497 = vmatpush.bf16.xpose.msra.mxu0 %v488
        %498 = vmatmul.bf16.gmra.mxu0 %v485
        %v499 = vpop.f32.mrf.mxu0
        %v500 = vadd.f32 0.0, %v499
        %v501 = vpop.f32.mrf.mxu0
        %502 = vdwg.mxu0
        %v503 = vsel %vm288, %v500, -1e+30
        %v504 = vsel %vm294, %v503, -inf
        %505 = vmax.xlane.f32.xlu0 %v504
        %v506 = vpop.xlane.xlu0 %505
        %v507 = vsub.f32 %v503, %v506
        %v508 = vmul.f32 %v507, 1.442695
        %v509 = vpow.pop %v508
        %v510 = vsel %vm294, %v509, 0.0
        %511 = vadd.xlane.f32.xlu0 %v510
        %v512 = vpop.xlane.xlu0 %511
        %v513 = vrcp.pop %v512
        %v514 = vmul.f32 %v509, %v513
        %v515 = vpack.c.bf16 %v514, %v514
        %516 = vrot.lane.b32.xlu0 %v291, 40
        %v517 = vpop.permute.xlu0 %516
        %v519 = vsel %vm294, %v515, 0
        %v522 = vsel %vm332, %v517, 0
        %524 = vmatpush.bf16.msra.mxu0 0
        %525 = vmatpush.bf16.msra.mxu0 0
        %526 = vmatpush.bf16.msra.mxu0 0
        %527 = vmatpush.bf16.msra.mxu0 0
        %528 = vmatpush.bf16.msra.mxu0 0
        %529 = vmatpush.bf16.msra.mxu0 0
        %530 = vmatpush.bf16.msra.mxu0 0
        %531 = vmatpush.bf16.msra.mxu0 %v522
        %532 = vmatmul.bf16.gmra.mxu0 %v519
        %v533 = vpop.f32.mrf.mxu0
        %v534 = vadd.f32 0.0, %v533
        %v535 = vpop.f32.mrf.mxu0
        %536 = vdwg.mxu0
        %v537 = vpack.c.bf16 %v534, %v534
        %539 = vrot.lane.b32.xlu0 %v537, 24
        %v540 = vpop.permute.xlu0 %539
        %vm542 = vcmask 257216
        %543 = vst.msk [vmem:[#allocation2] sm:$0xf] %vm542, %v540
        %v544 = vld [vmem:[#allocation2] sm:$0xf]
        %v545 = vld [vmem:[#allocation8] sm:$0xf]
        %v546 = vld [vmem:[#allocation8 + $0x4] sm:$0xf]
        %v547 = vld [vmem:[#allocation8 + $0x8] sm:$0xf]
        %v548 = vld [vmem:[#allocation8 + $0xc] sm:$0xf]
        %v549 = vld [vmem:[%s3] sm:$0x1]
        %v551 = vperm.slane %v549, 0
        %v557 = vunpack.c.l.b16 %v545
        %v558 = vunpack.c.l.b16 %v546
        %v559 = vunpack.c.l.b16 %v547
        %v560 = vunpack.c.l.b16 %v548
        %v561 = vpack.c.b16 %v558, %v557
        %v562 = vpack.c.b16 %v560, %v559
        %v566 = vsel %vm266, %v544, 0
        %568 = vmatpush.bf16.msra.mxu0 0
        %569 = vmatpush.bf16.msra.mxu0 0
        %570 = vmatpush.bf16.msra.mxu0 0
        %571 = vmatpush.bf16.msra.mxu0 0
        %572 = vmatpush.bf16.msra.mxu0 0
        %573 = vmatpush.bf16.msra.mxu0 0
        %574 = vmatpush.bf16.msra.mxu0 %v562
        %575 = vmatpush.bf16.msra.mxu0 %v561
        %576 = vmatmul.bf16.gmra.mxu0 %v566
        %v577 = vpop.f32.mrf.mxu0
        %v578 = vadd.f32 %v551, %v577
        %v579 = vpop.f32.mrf.mxu0
        %580 = vdwg.mxu0
        %581 = vst [vmem:[%s247] sm:$0xff] %v578
        %s582 = sand.u32 %s119, 1
        %s583 = scalar_lea.sflag [#allocation5], %s582
        %s584 = sand.u32 %s119, 1
        %s585 = smul.addr %s584, 8
        %s586 = scalar_lea.vmem [#allocation9], %s585
        // Predicated region
        $region49: #{tpu_custom_call.1} parent=35 // pred_check
          %p587 = pneg %p129
        $region50: #{tpu_custom_call.1} parent=35 // pred_check_branch
          %589 = sbr.rel (%p587) target = $region52
        $region51: #{tpu_custom_call.1} parent=35 // pred_region
          %591 = vsyncadd %s583, 0
          %s592 = smul.addr %s22, 8
          %s593 = scalar_lea.hbm %s4, %s592
          %s595 = sshll.u32 %s586, 4
          %s596 = int_to_ptr.vmem [resolvable:$true] %s595
          %s597 = sshll.u32 %s593, 4
          %s598 = int_to_ptr.hbm [resolvable:$true] %s597
          %600 = dma.vmem_to_hbm [thread:$0]  %s596, 128, %s598, %s583
        $region52: #{tpu_custom_call.1} parent=35 // pred_fallthru
          _
      $region36: #{tpu_custom_call.1} parent=5 // pred_fallthru
        _
      %p601 = scmp.le.s32.totalorder 2, %s17
      // Predicated region
      $region53: #{tpu_custom_call.1} parent=5 // pred_check
        %p602 = pneg %p601
      $region54: #{tpu_custom_call.1} parent=5 // pred_check_branch
        %604 = sbr.rel (%p602) target = $region56
      $region55: #{tpu_custom_call.1} parent=5 // pred_region
        %s605 = ssub.s32 %s17, 2
        // Predicated region
        $region57: #{tpu_custom_call.1} parent=55 // pred_check
          %p606 = pneg %p135
        $region58: #{tpu_custom_call.1} parent=55 // pred_check_branch
          %608 = sbr.rel (%p606) target = $region60
        $region59: #{tpu_custom_call.1} parent=55 // pred_region
          %s609 = sand.u32 %s120, 1
          %s610 = scalar_lea.sflag [#allocation5], %s609
          %s611 = sand.u32 %s120, 1
          %s612 = smul.addr %s611, 8
          %s613 = scalar_lea.vmem [#allocation9], %s612
          %615 = dma.done %s610, 128
        $region60: #{tpu_custom_call.1} parent=55 // pred_fallthru
          _
      $region56: #{tpu_custom_call.1} parent=5 // pred_fallthru
        _
    $region6: #{tpu_custom_call.1} parent=1 // loop_footer
      %s21 = sadd.s32 1, %s17
    $region7: #{tpu_custom_call.1} parent=1 // loop_footer_branch
      %16 = sbr.rel target = $region3
    $region8: #{tpu_custom_call.1} parent=1 // loop_exit
      _
    %616 = vsyncpa [#allocation4], 1
    %s617 = scalar_lea.sflag [#allocation4], 1
    %618 = vsyncpa %s617, 1
    %619 = vsyncpa [#allocation7], 1
    %620 = vsyncpa [#allocation5], 1
    %s621 = scalar_lea.sflag [#allocation5], 1
    %622 = vsyncpa %s621, 1

</llo_original>
